<compile_context>
chip_gen: v5e
topology: v5e:2x2
jax: 0.10.0
libtpu: 0.0.40
codegen_flags: <defaults>
</compile_context>

<pallas_src>
import jax
import jax.numpy as jnp
from jax.experimental import pallas as pl
from jax.experimental.pallas import tpu as pltpu


def _round_up(n, m):
    return ((n + m - 1) // m) * m


def rnn_kernel(x_ref, h0_ref, wx_ref, wh_ref, b_ref, out_ref):
    T, B, K = x_ref.shape          # K = d_in (unpadded)
    D = wh_ref.shape[1]            # D = d_latent padded to 128

    # ---- Phase 1 (hoisted out of the recurrence): u[t] = x[t] @ Wx + b ----
    bias = b_ref[...].reshape(1, 1, D)
    if K <= 8:
        # Tiny input dim: VPU broadcast outer product, no lane padding of K.
        u = jnp.broadcast_to(bias, (T, B, D))
        for k in range(K):                       # static, K is tiny
            xk = x_ref[:, :, k:k + 1]            # (T, B, 1)
            wk = wx_ref[k:k + 1, :].reshape(1, 1, D)
            u = u + xk * wk
    else:
        # General case: one (T*B, K) x (K, D) MXU matmul.
        x_all = x_ref[...].reshape(T * B, K)
        u = (jnp.dot(x_all, wx_ref[...], preferred_element_type=jnp.float32)
             + b_ref[...]).reshape(T, B, D)

    # Hoist the recurrent weight load out of the unrolled loop body.
    wh = wh_ref[...]

    # ---- Phase 2: serial recurrence  h_t = tanh(u[t] + h_{t-1} @ Wh) ----
    # Fully unrolled (T is small and static); u[t] is a static register slice,
    # so nothing on the critical path touches VMEM except the output store.
    h = h0_ref[...]
    for t in range(T):
        pre = u[t] + jnp.dot(h, wh, preferred_element_type=jnp.float32)
        h = jnp.tanh(pre)
        out_ref[t] = h


@jax.jit
def rnn_forward(x, h0, wx, wh, b):
    """x: (T, B, d_in), h0: (B, d_latent), wx: (d_in, d_latent),
    wh: (d_latent, d_latent), b: (1, d_latent) -> (T, B, d_latent)."""
    T, B, d_in = x.shape
    d_latent = h0.shape[1]

    B_pad = _round_up(max(B, 8), 8)          # sublane-dense batch
    D_pad = _round_up(max(d_latent, 128), 128)   # lane-dense hidden dim

    # Zero-pad batch/hidden dims only; d_in stays unpadded (handled on VPU).
    xp = jnp.zeros((T, B_pad, d_in), jnp.float32).at[:, :B, :].set(x)
    h0p = jnp.zeros((B_pad, D_pad), jnp.float32).at[:B, :d_latent].set(h0)
    wxp = jnp.zeros((d_in, D_pad), jnp.float32).at[:, :d_latent].set(wx)
    whp = jnp.zeros((D_pad, D_pad), jnp.float32).at[:d_latent, :d_latent].set(wh)
    bp = jnp.zeros((1, D_pad), jnp.float32).at[:, :d_latent].set(b)

    vmem = pl.BlockSpec(memory_space=pltpu.MemorySpace.VMEM)

    out_pad = pl.pallas_call(
        rnn_kernel,
        out_shape=jax.ShapeDtypeStruct((T, B_pad, D_pad), jnp.float32),
        in_specs=[vmem, vmem, vmem, vmem, vmem],
        out_specs=vmem,
    )(xp, h0p, wxp, whp, bp)

    return out_pad[:, :B, :d_latent]


def rnn_reference(x, h0, wx, wh, b):
    hs = []
    h = h0
    for t in range(x.shape[0]):
        h = jnp.tanh(x[t] @ wx + h @ wh + b)
        hs.append(h)
    return jnp.stack(hs, axis=0)


if __name__ == "__main__":
    d_dim = 1
    d_latent = 20
    seq = 8
    batch = 1  # matches h = torch.zeros((1, d_latent)) in the reference script

    key = jax.random.PRNGKey(0)
    kx, kwx, kwh, kb = jax.random.split(key, 4)

    x = jax.random.normal(kx, (seq, batch, d_dim), dtype=jnp.float32)
    h0 = jnp.zeros((batch, d_latent), dtype=jnp.float32)

    # Deterministic "Linear(d_dim + d_latent, d_latent)" parameters, stored
    # pre-transposed and split into the x-part and h-part of the weight:
    #   cat(x, h) @ W^T + b  ==  x @ Wx + h @ Wh + b
    bound = 1.0 / jnp.sqrt(jnp.float32(d_dim + d_latent))
    wx = jax.random.uniform(kwx, (d_dim, d_latent), jnp.float32, -bound, bound)
    wh = jax.random.uniform(kwh, (d_latent, d_latent), jnp.float32, -bound, bound)
    b = jax.random.uniform(kb, (1, d_latent), jnp.float32, -bound, bound)

    out = rnn_forward(x, h0, wx, wh, b)
    out = jax.block_until_ready(out)

    ref = rnn_reference(x, h0, wx, wh, b)
    assert out.shape == (seq, batch, d_latent)
    assert jnp.allclose(out, ref, atol=1e-5, rtol=1e-5)

    print("KERNEL_OK")
</pallas_src>

<mosaic_0001>
module attributes {stable_mosaic.version = 11 : i64} {
  func.func @rnn_kernel(%arg0: memref<8x8x1xf32, #tpu.memory_space<vmem>>, %arg1: memref<8x128xf32, #tpu.memory_space<vmem>>, %arg2: memref<1x128xf32, #tpu.memory_space<vmem>>, %arg3: memref<128x128xf32, #tpu.memory_space<vmem>>, %arg4: memref<1x128xf32, #tpu.memory_space<vmem>>, %arg5: memref<8x8x128xf32, #tpu.memory_space<vmem>>) attributes {dimension_semantics = [], scalar_prefetch = 0 : i64, scratch_operands = 0 : i64, tpu.core_type = #tpu.core_type<tc>} {
    %c0 = arith.constant 0 : index
    %c0_0 = arith.constant 0 : index
    %0 = vector.load %arg4[%c0, %c0_0] : memref<1x128xf32, #tpu.memory_space<vmem>>, vector<1x128xf32>
    %1 = vector.shape_cast %0 : vector<1x128xf32> to vector<1x1x128xf32>
    %2 = vector.shape_cast %1 : vector<1x1x128xf32> to vector<1x1x128xf32>
    %3 = vector.broadcast %2 : vector<1x1x128xf32> to vector<8x8x128xf32>
    %c0_1 = arith.constant 0 : index
    %c0_2 = arith.constant 0 : index
    %c0_3 = arith.constant 0 : index
    %4 = vector.load %arg0[%c0_1, %c0_2, %c0_3] : memref<8x8x1xf32, #tpu.memory_space<vmem>>, vector<8x8x1xf32>
    %c0_4 = arith.constant 0 : index
    %c0_5 = arith.constant 0 : index
    %5 = vector.load %arg2[%c0_4, %c0_5] : memref<1x128xf32, #tpu.memory_space<vmem>>, vector<1x128xf32>
    %6 = vector.shape_cast %5 : vector<1x128xf32> to vector<1x1x128xf32>
    %7 = vector.broadcast %4 : vector<8x8x1xf32> to vector<8x8x128xf32>
    %8 = vector.broadcast %6 : vector<1x1x128xf32> to vector<8x8x128xf32>
    %9 = arith.mulf %7, %8 : vector<8x8x128xf32>
    %10 = arith.addf %3, %9 : vector<8x8x128xf32>
    %c0_6 = arith.constant 0 : index
    %c0_7 = arith.constant 0 : index
    %11 = vector.load %arg3[%c0_6, %c0_7] : memref<128x128xf32, #tpu.memory_space<vmem>>, vector<128x128xf32>
    %c0_8 = arith.constant 0 : index
    %c0_9 = arith.constant 0 : index
    %12 = vector.load %arg1[%c0_8, %c0_9] : memref<8x128xf32, #tpu.memory_space<vmem>>, vector<8x128xf32>
    %13 = vector.extract_strided_slice %10 {offsets = [0, 0, 0], sizes = [1, 8, 128], strides = [1, 1, 1]} : vector<8x8x128xf32> to vector<1x8x128xf32>
    %14 = vector.shape_cast %13 : vector<1x8x128xf32> to vector<8x128xf32>
    %cst = arith.constant dense<0.000000e+00> : vector<8x128xf32>
    %15 = tpu.matmul %12, %11, %cst {dimension_numbers = #tpu.dot_dimension_numbers<[1], [0], [0], [1], [0, 0, 1, 1], [], []>} : vector<8x128xf32>, vector<128x128xf32>, vector<8x128xf32> -> vector<8x128xf32>
    %16 = arith.addf %14, %15 : vector<8x128xf32>
    %17 = math.tanh %16 : vector<8x128xf32>
    %c0_10 = arith.constant 0 : index
    %c0_11 = arith.constant 0 : index
    %c0_12 = arith.constant 0 : index
    %18 = vector.load %arg5[%c0_10, %c0_11, %c0_12] : memref<8x8x128xf32, #tpu.memory_space<vmem>>, vector<1x8x128xf32>
    %19 = vector.shape_cast %18 : vector<1x8x128xf32> to vector<8x128xf32>
    %20 = vector.shape_cast %17 : vector<8x128xf32> to vector<1x8x128xf32>
    tpu.vector_store %arg5[%c0_10, %c0_11, %c0_12], %20 {strides = array<i32>} : memref<8x8x128xf32, #tpu.memory_space<vmem>>, vector<1x8x128xf32>,
    %21 = vector.extract_strided_slice %10 {offsets = [1, 0, 0], sizes = [1, 8, 128], strides = [1, 1, 1]} : vector<8x8x128xf32> to vector<1x8x128xf32>
    %22 = vector.shape_cast %21 : vector<1x8x128xf32> to vector<8x128xf32>
    %cst_13 = arith.constant dense<0.000000e+00> : vector<8x128xf32>
    %23 = tpu.matmul %17, %11, %cst_13 {dimension_numbers = #tpu.dot_dimension_numbers<[1], [0], [0], [1], [0, 0, 1, 1], [], []>} : vector<8x128xf32>, vector<128x128xf32>, vector<8x128xf32> -> vector<8x128xf32>
    %24 = arith.addf %22, %23 : vector<8x128xf32>
    %25 = math.tanh %24 : vector<8x128xf32>
    %c1 = arith.constant 1 : index
    %c0_14 = arith.constant 0 : index
    %c0_15 = arith.constant 0 : index
    %26 = vector.load %arg5[%c1, %c0_14, %c0_15] : memref<8x8x128xf32, #tpu.memory_space<vmem>>, vector<1x8x128xf32>
    %27 = vector.shape_cast %26 : vector<1x8x128xf32> to vector<8x128xf32>
    %28 = vector.shape_cast %25 : vector<8x128xf32> to vector<1x8x128xf32>
    tpu.vector_store %arg5[%c1, %c0_14, %c0_15], %28 {strides = array<i32>} : memref<8x8x128xf32, #tpu.memory_space<vmem>>, vector<1x8x128xf32>,
    %29 = vector.extract_strided_slice %10 {offsets = [2, 0, 0], sizes = [1, 8, 128], strides = [1, 1, 1]} : vector<8x8x128xf32> to vector<1x8x128xf32>
    %30 = vector.shape_cast %29 : vector<1x8x128xf32> to vector<8x128xf32>
    %cst_16 = arith.constant dense<0.000000e+00> : vector<8x128xf32>
    %31 = tpu.matmul %25, %11, %cst_16 {dimension_numbers = #tpu.dot_dimension_numbers<[1], [0], [0], [1], [0, 0, 1, 1], [], []>} : vector<8x128xf32>, vector<128x128xf32>, vector<8x128xf32> -> vector<8x128xf32>
    %32 = arith.addf %30, %31 : vector<8x128xf32>
    %33 = math.tanh %32 : vector<8x128xf32>
    %c2 = arith.constant 2 : index
    %c0_17 = arith.constant 0 : index
    %c0_18 = arith.constant 0 : index
    %34 = vector.load %arg5[%c2, %c0_17, %c0_18] : memref<8x8x128xf32, #tpu.memory_space<vmem>>, vector<1x8x128xf32>
    %35 = vector.shape_cast %34 : vector<1x8x128xf32> to vector<8x128xf32>
    %36 = vector.shape_cast %33 : vector<8x128xf32> to vector<1x8x128xf32>
    tpu.vector_store %arg5[%c2, %c0_17, %c0_18], %36 {strides = array<i32>} : memref<8x8x128xf32, #tpu.memory_space<vmem>>, vector<1x8x128xf32>,
    %37 = vector.extract_strided_slice %10 {offsets = [3, 0, 0], sizes = [1, 8, 128], strides = [1, 1, 1]} : vector<8x8x128xf32> to vector<1x8x128xf32>
    %38 = vector.shape_cast %37 : vector<1x8x128xf32> to vector<8x128xf32>
    %cst_19 = arith.constant dense<0.000000e+00> : vector<8x128xf32>
    %39 = tpu.matmul %33, %11, %cst_19 {dimension_numbers = #tpu.dot_dimension_numbers<[1], [0], [0], [1], [0, 0, 1, 1], [], []>} : vector<8x128xf32>, vector<128x128xf32>, vector<8x128xf32> -> vector<8x128xf32>
    %40 = arith.addf %38, %39 : vector<8x128xf32>
    %41 = math.tanh %40 : vector<8x128xf32>
    %c3 = arith.constant 3 : index
    %c0_20 = arith.constant 0 : index
    %c0_21 = arith.constant 0 : index
    %42 = vector.load %arg5[%c3, %c0_20, %c0_21] : memref<8x8x128xf32, #tpu.memory_space<vmem>>, vector<1x8x128xf32>
    %43 = vector.shape_cast %42 : vector<1x8x128xf32> to vector<8x128xf32>
    %44 = vector.shape_cast %41 : vector<8x128xf32> to vector<1x8x128xf32>
    tpu.vector_store %arg5[%c3, %c0_20, %c0_21], %44 {strides = array<i32>} : memref<8x8x128xf32, #tpu.memory_space<vmem>>, vector<1x8x128xf32>,
    %45 = vector.extract_strided_slice %10 {offsets = [4, 0, 0], sizes = [1, 8, 128], strides = [1, 1, 1]} : vector<8x8x128xf32> to vector<1x8x128xf32>
    %46 = vector.shape_cast %45 : vector<1x8x128xf32> to vector<8x128xf32>
    %cst_22 = arith.constant dense<0.000000e+00> : vector<8x128xf32>
    %47 = tpu.matmul %41, %11, %cst_22 {dimension_numbers = #tpu.dot_dimension_numbers<[1], [0], [0], [1], [0, 0, 1, 1], [], []>} : vector<8x128xf32>, vector<128x128xf32>, vector<8x128xf32> -> vector<8x128xf32>
    %48 = arith.addf %46, %47 : vector<8x128xf32>
    %49 = math.tanh %48 : vector<8x128xf32>
    %c4 = arith.constant 4 : index
    %c0_23 = arith.constant 0 : index
    %c0_24 = arith.constant 0 : index
    %50 = vector.load %arg5[%c4, %c0_23, %c0_24] : memref<8x8x128xf32, #tpu.memory_space<vmem>>, vector<1x8x128xf32>
    %51 = vector.shape_cast %50 : vector<1x8x128xf32> to vector<8x128xf32>
    %52 = vector.shape_cast %49 : vector<8x128xf32> to vector<1x8x128xf32>
    tpu.vector_store %arg5[%c4, %c0_23, %c0_24], %52 {strides = array<i32>} : memref<8x8x128xf32, #tpu.memory_space<vmem>>, vector<1x8x128xf32>,
    %53 = vector.extract_strided_slice %10 {offsets = [5, 0, 0], sizes = [1, 8, 128], strides = [1, 1, 1]} : vector<8x8x128xf32> to vector<1x8x128xf32>
    %54 = vector.shape_cast %53 : vector<1x8x128xf32> to vector<8x128xf32>
    %cst_25 = arith.constant dense<0.000000e+00> : vector<8x128xf32>
    %55 = tpu.matmul %49, %11, %cst_25 {dimension_numbers = #tpu.dot_dimension_numbers<[1], [0], [0], [1], [0, 0, 1, 1], [], []>} : vector<8x128xf32>, vector<128x128xf32>, vector<8x128xf32> -> vector<8x128xf32>
    %56 = arith.addf %54, %55 : vector<8x128xf32>
    %57 = math.tanh %56 : vector<8x128xf32>
    %c5 = arith.constant 5 : index
    %c0_26 = arith.constant 0 : index
    %c0_27 = arith.constant 0 : index
    %58 = vector.load %arg5[%c5, %c0_26, %c0_27] : memref<8x8x128xf32, #tpu.memory_space<vmem>>, vector<1x8x128xf32>
    %59 = vector.shape_cast %58 : vector<1x8x128xf32> to vector<8x128xf32>
    %60 = vector.shape_cast %57 : vector<8x128xf32> to vector<1x8x128xf32>
    tpu.vector_store %arg5[%c5, %c0_26, %c0_27], %60 {strides = array<i32>} : memref<8x8x128xf32, #tpu.memory_space<vmem>>, vector<1x8x128xf32>,
    %61 = vector.extract_strided_slice %10 {offsets = [6, 0, 0], sizes = [1, 8, 128], strides = [1, 1, 1]} : vector<8x8x128xf32> to vector<1x8x128xf32>
    %62 = vector.shape_cast %61 : vector<1x8x128xf32> to vector<8x128xf32>
    %cst_28 = arith.constant dense<0.000000e+00> : vector<8x128xf32>
    %63 = tpu.matmul %57, %11, %cst_28 {dimension_numbers = #tpu.dot_dimension_numbers<[1], [0], [0], [1], [0, 0, 1, 1], [], []>} : vector<8x128xf32>, vector<128x128xf32>, vector<8x128xf32> -> vector<8x128xf32>
    %64 = arith.addf %62, %63 : vector<8x128xf32>
    %65 = math.tanh %64 : vector<8x128xf32>
    %c6 = arith.constant 6 : index
    %c0_29 = arith.constant 0 : index
    %c0_30 = arith.constant 0 : index
    %66 = vector.load %arg5[%c6, %c0_29, %c0_30] : memref<8x8x128xf32, #tpu.memory_space<vmem>>, vector<1x8x128xf32>
    %67 = vector.shape_cast %66 : vector<1x8x128xf32> to vector<8x128xf32>
    %68 = vector.shape_cast %65 : vector<8x128xf32> to vector<1x8x128xf32>
    tpu.vector_store %arg5[%c6, %c0_29, %c0_30], %68 {strides = array<i32>} : memref<8x8x128xf32, #tpu.memory_space<vmem>>, vector<1x8x128xf32>,
    %69 = vector.extract_strided_slice %10 {offsets = [7, 0, 0], sizes = [1, 8, 128], strides = [1, 1, 1]} : vector<8x8x128xf32> to vector<1x8x128xf32>
    %70 = vector.shape_cast %69 : vector<1x8x128xf32> to vector<8x128xf32>
    %cst_31 = arith.constant dense<0.000000e+00> : vector<8x128xf32>
    %71 = tpu.matmul %65, %11, %cst_31 {dimension_numbers = #tpu.dot_dimension_numbers<[1], [0], [0], [1], [0, 0, 1, 1], [], []>} : vector<8x128xf32>, vector<128x128xf32>, vector<8x128xf32> -> vector<8x128xf32>
    %72 = arith.addf %70, %71 : vector<8x128xf32>
    %73 = math.tanh %72 : vector<8x128xf32>
    %c7 = arith.constant 7 : index
    %c0_32 = arith.constant 0 : index
    %c0_33 = arith.constant 0 : index
    %74 = vector.load %arg5[%c7, %c0_32, %c0_33] : memref<8x8x128xf32, #tpu.memory_space<vmem>>, vector<1x8x128xf32>
    %75 = vector.shape_cast %74 : vector<1x8x128xf32> to vector<8x128xf32>
    %76 = vector.shape_cast %73 : vector<8x128xf32> to vector<1x8x128xf32>
    tpu.vector_store %arg5[%c7, %c0_32, %c0_33], %76 {strides = array<i32>} : memref<8x8x128xf32, #tpu.memory_space<vmem>>, vector<1x8x128xf32>,
    return
  }
}

</mosaic_0001>

<llo_original>
// kernel: rnn_forward.1
$region0: #{rnn_forward.1}
  #allocation0 [shape = 'u32[]', space=smem, size = 0x4, offset = 0x4, fixed_abs, tag = 'smem constant byte address 0x4 - core index']
  #allocation1 [shape = 'u32[72,128]{1,0:T(1,128)}', space=vmem, size = 0x9000, scoped, tag = 'internal scratch']
  %s0 = inlined_call_operand.vmem [shape: f32[8,8,1], index: 0, kind: input, shape index: {}]
  %s1 = inlined_call_operand.vmem [shape: f32[8,128], index: 1, kind: input, shape index: {}]
  %s2 = inlined_call_operand.vmem [shape: f32[1,128], index: 2, kind: input, shape index: {}]
  %s3 = inlined_call_operand.vmem [shape: f32[128,128], index: 3, kind: input, shape index: {}]
  %s4 = inlined_call_operand.vmem [shape: f32[1,128], index: 4, kind: input, shape index: {}]
  %s5 = inlined_call_operand.vmem [shape: f32[8,8,128], index: 5, kind: output, shape index: {}]
  %s6 = sld [smem:[#allocation0]]
  $region30: #{rnn_forward.1} parent=0
    _
  %s8 = ssub.s32 1, %s6
  %s9 = scalar_select 0, %s8, %s6
  // Predicated region
  $region2: #{rnn_forward.1} parent=0 // pred_check
    _
  $region3: #{rnn_forward.1} parent=0 // pred_check_branch
    %11 = sbr.rel (0) target = $region5
  $region4: #{rnn_forward.1} parent=0 // pred_region
    _
  $region5: #{rnn_forward.1} parent=0 // pred_fallthru
    _
  // Predicated region
  $region6: #{rnn_forward.1} parent=0 // pred_check
    _
  $region7: #{rnn_forward.1} parent=0 // pred_check_branch
    %13 = sbr.rel (0) target = $region9
  $region8: #{rnn_forward.1} parent=0 // pred_region
    _
  $region9: #{rnn_forward.1} parent=0 // pred_fallthru
    _
  // Predicated region
  $region10: #{rnn_forward.1} parent=0 // pred_check
    _
  $region11: #{rnn_forward.1} parent=0 // pred_check_branch
    %15 = sbr.rel (0) target = $region13
  $region12: #{rnn_forward.1} parent=0 // pred_region
    _
  $region13: #{rnn_forward.1} parent=0 // pred_fallthru
    _
  // Predicated region
  $region14: #{rnn_forward.1} parent=0 // pred_check
    _
  $region15: #{rnn_forward.1} parent=0 // pred_check_branch
    %17 = sbr.rel (0) target = $region17
  $region16: #{rnn_forward.1} parent=0 // pred_region
    _
  $region17: #{rnn_forward.1} parent=0 // pred_fallthru
    _
  // Predicated region
  $region18: #{rnn_forward.1} parent=0 // pred_check
    _
  $region19: #{rnn_forward.1} parent=0 // pred_check_branch
    %19 = sbr.rel (0) target = $region21
  $region20: #{rnn_forward.1} parent=0 // pred_region
    _
  $region21: #{rnn_forward.1} parent=0 // pred_fallthru
    _
  %v20 = vld [vmem:[%s4] sm:$0x1]
  %v22 = vperm.slane %v20, 0
  %v24 = vld [vmem:[%s0] sm:$0xff]
  %v25 = vld [vmem:[%s0 + $0x8] sm:$0xff]
  %v26 = vld [vmem:[%s0 + $0x10] sm:$0xff]
  %v27 = vld [vmem:[%s0 + $0x18] sm:$0xff]
  %v28 = vld [vmem:[%s0 + $0x20] sm:$0xff]
  %v29 = vld [vmem:[%s0 + $0x28] sm:$0xff]
  %v30 = vld [vmem:[%s0 + $0x30] sm:$0xff]
  %v31 = vld [vmem:[%s0 + $0x38] sm:$0xff]
  %v32 = vld [vmem:[%s2] sm:$0x1]
  %34 = vset.pattern.permute.xlu0 0
  %35 = vperm.xlu0 %34, %v24
  %v36 = vpop.permute.xlu0 %35
  %39 = vset.pattern.permute.xlu0 0
  %40 = vperm.xlu0 %39, %v25
  %v41 = vpop.permute.xlu0 %40
  %44 = vset.pattern.permute.xlu0 0
  %45 = vperm.xlu0 %44, %v26
  %v46 = vpop.permute.xlu0 %45
  %49 = vset.pattern.permute.xlu0 0
  %50 = vperm.xlu0 %49, %v27
  %v51 = vpop.permute.xlu0 %50
  %54 = vset.pattern.permute.xlu0 0
  %55 = vperm.xlu0 %54, %v28
  %v56 = vpop.permute.xlu0 %55
  %59 = vset.pattern.permute.xlu0 0
  %60 = vperm.xlu0 %59, %v29
  %v61 = vpop.permute.xlu0 %60
  %64 = vset.pattern.permute.xlu0 0
  %65 = vperm.xlu0 %64, %v30
  %v66 = vpop.permute.xlu0 %65
  %69 = vset.pattern.permute.xlu0 0
  %70 = vperm.xlu0 %69, %v31
  %v71 = vpop.permute.xlu0 %70
  %v74 = vperm.slane %v32, 0
  %v76 = vmul.f32 %v36, %v74
  %v77 = vmul.f32 %v41, %v74
  %v78 = vmul.f32 %v46, %v74
  %v79 = vmul.f32 %v51, %v74
  %v80 = vmul.f32 %v56, %v74
  %v81 = vmul.f32 %v61, %v74
  %v82 = vmul.f32 %v66, %v74
  %v83 = vmul.f32 %v71, %v74
  %v84 = vadd.f32 %v22, %v76
  %v85 = vadd.f32 %v22, %v77
  %v86 = vadd.f32 %v22, %v78
  %v87 = vadd.f32 %v22, %v79
  %v88 = vadd.f32 %v22, %v80
  %v89 = vadd.f32 %v22, %v81
  %v90 = vadd.f32 %v22, %v82
  %v91 = vadd.f32 %v22, %v83
  %v92 = vld [vmem:[%s3] sm:$0xff]
  %v93 = vld [vmem:[%s3 + $0x8] sm:$0xff]
  %v94 = vld [vmem:[%s3 + $0x10] sm:$0xff]
  %v95 = vld [vmem:[%s3 + $0x18] sm:$0xff]
  %v96 = vld [vmem:[%s3 + $0x20] sm:$0xff]
  %v97 = vld [vmem:[%s3 + $0x28] sm:$0xff]
  %v98 = vld [vmem:[%s3 + $0x30] sm:$0xff]
  %v99 = vld [vmem:[%s3 + $0x38] sm:$0xff]
  %v100 = vld [vmem:[%s3 + $0x40] sm:$0xff]
  %v101 = vld [vmem:[%s3 + $0x48] sm:$0xff]
  %v102 = vld [vmem:[%s3 + $0x50] sm:$0xff]
  %v103 = vld [vmem:[%s3 + $0x58] sm:$0xff]
  %v104 = vld [vmem:[%s3 + $0x60] sm:$0xff]
  %v105 = vld [vmem:[%s3 + $0x68] sm:$0xff]
  %v106 = vld [vmem:[%s3 + $0x70] sm:$0xff]
  %v107 = vld [vmem:[%s3 + $0x78] sm:$0xff]
  %v108 = vld [vmem:[%s1] sm:$0xff]
  %109 = vmatpush.msra.mxu0 %v107
  %110 = vmatpush.msra.mxu0 %v106
  %111 = vmatpush.msra.mxu0 %v105
  %112 = vmatpush.msra.mxu0 %v104
  %113 = vmatpush.msra.mxu0 %v103
  %114 = vmatpush.msra.mxu0 %v102
  %115 = vmatpush.msra.mxu0 %v101
  %116 = vmatpush.msra.mxu0 %v100
  %117 = vmatpush.msra.mxu0 %v99
  %118 = vmatpush.msra.mxu0 %v98
  %119 = vmatpush.msra.mxu0 %v97
  %120 = vmatpush.msra.mxu0 %v96
  %121 = vmatpush.msra.mxu0 %v95
  %122 = vmatpush.msra.mxu0 %v94
  %123 = vmatpush.msra.mxu0 %v93
  %124 = vmatpush.msra.mxu0 %v92
  %125 = vmatmul.f32.gmra.mxu0 %v108
  %v126 = vpop.f32.mrf.mxu0
  %v127 = vadd.f32 0.0, %v126
  %128 = vdwg.mxu0
  %v129 = vadd.f32 %v84, %v127
  %v130 = vtanh.pop %v129
  %131 = vst [vmem:[%s5] sm:$0xff] %v130
  %132 = vmatpush.msra.mxu0 %v107
  %133 = vmatpush.msra.mxu0 %v106
  %134 = vmatpush.msra.mxu0 %v105
  %135 = vmatpush.msra.mxu0 %v104
  %136 = vmatpush.msra.mxu0 %v103
  %137 = vmatpush.msra.mxu0 %v102
  %138 = vmatpush.msra.mxu0 %v101
  %139 = vmatpush.msra.mxu0 %v100
  %140 = vmatpush.msra.mxu0 %v99
  %141 = vmatpush.msra.mxu0 %v98
  %142 = vmatpush.msra.mxu0 %v97
  %143 = vmatpush.msra.mxu0 %v96
  %144 = vmatpush.msra.mxu0 %v95
  %145 = vmatpush.msra.mxu0 %v94
  %146 = vmatpush.msra.mxu0 %v93
  %147 = vmatpush.msra.mxu0 %v92
  %148 = vmatmul.f32.gmra.mxu0 %v130
  %v149 = vpop.f32.mrf.mxu0
  %v150 = vadd.f32 0.0, %v149
  %151 = vdwg.mxu0
  %v152 = vadd.f32 %v85, %v150
  %v153 = vtanh.pop %v152
  %s154 = scalar_lea.vmem %s5, 8
  %155 = vst [vmem:[%s154] sm:$0xff] %v153
  %156 = vmatpush.msra.mxu0 %v107
  %157 = vmatpush.msra.mxu0 %v106
  %158 = vmatpush.msra.mxu0 %v105
  %159 = vmatpush.msra.mxu0 %v104
  %160 = vmatpush.msra.mxu0 %v103
  %161 = vmatpush.msra.mxu0 %v102
  %162 = vmatpush.msra.mxu0 %v101
  %163 = vmatpush.msra.mxu0 %v100
  %164 = vmatpush.msra.mxu0 %v99
  %165 = vmatpush.msra.mxu0 %v98
  %166 = vmatpush.msra.mxu0 %v97
  %167 = vmatpush.msra.mxu0 %v96
  %168 = vmatpush.msra.mxu0 %v95
  %169 = vmatpush.msra.mxu0 %v94
  %170 = vmatpush.msra.mxu0 %v93
  %171 = vmatpush.msra.mxu0 %v92
  %172 = vmatmul.f32.gmra.mxu0 %v153
  %v173 = vpop.f32.mrf.mxu0
  %v174 = vadd.f32 0.0, %v173
  %175 = vdwg.mxu0
  %v176 = vadd.f32 %v86, %v174
  %v177 = vtanh.pop %v176
  %s178 = scalar_lea.vmem %s5, 16
  %179 = vst [vmem:[%s178] sm:$0xff] %v177
  %180 = vmatpush.msra.mxu0 %v107
  %181 = vmatpush.msra.mxu0 %v106
  %182 = vmatpush.msra.mxu0 %v105
  %183 = vmatpush.msra.mxu0 %v104
  %184 = vmatpush.msra.mxu0 %v103
  %185 = vmatpush.msra.mxu0 %v102
  %186 = vmatpush.msra.mxu0 %v101
  %187 = vmatpush.msra.mxu0 %v100
  %188 = vmatpush.msra.mxu0 %v99
  %189 = vmatpush.msra.mxu0 %v98
  %190 = vmatpush.msra.mxu0 %v97
  %191 = vmatpush.msra.mxu0 %v96
  %192 = vmatpush.msra.mxu0 %v95
  %193 = vmatpush.msra.mxu0 %v94
  %194 = vmatpush.msra.mxu0 %v93
  %195 = vmatpush.msra.mxu0 %v92
  %196 = vmatmul.f32.gmra.mxu0 %v177
  %v197 = vpop.f32.mrf.mxu0
  %v198 = vadd.f32 0.0, %v197
  %199 = vdwg.mxu0
  %v200 = vadd.f32 %v87, %v198
  %v201 = vtanh.pop %v200
  %s202 = scalar_lea.vmem %s5, 24
  %203 = vst [vmem:[%s202] sm:$0xff] %v201
  %204 = vmatpush.msra.mxu0 %v107
  %205 = vmatpush.msra.mxu0 %v106
  %206 = vmatpush.msra.mxu0 %v105
  %207 = vmatpush.msra.mxu0 %v104
  %208 = vmatpush.msra.mxu0 %v103
  %209 = vmatpush.msra.mxu0 %v102
  %210 = vmatpush.msra.mxu0 %v101
  %211 = vmatpush.msra.mxu0 %v100
  %212 = vmatpush.msra.mxu0 %v99
  %213 = vmatpush.msra.mxu0 %v98
  %214 = vmatpush.msra.mxu0 %v97
  %215 = vmatpush.msra.mxu0 %v96
  %216 = vmatpush.msra.mxu0 %v95
  %217 = vmatpush.msra.mxu0 %v94
  %218 = vmatpush.msra.mxu0 %v93
  %219 = vmatpush.msra.mxu0 %v92
  %220 = vmatmul.f32.gmra.mxu0 %v201
  %v221 = vpop.f32.mrf.mxu0
  %v222 = vadd.f32 0.0, %v221
  %223 = vdwg.mxu0
  %v224 = vadd.f32 %v88, %v222
  %v225 = vtanh.pop %v224
  %s226 = scalar_lea.vmem %s5, 32
  %227 = vst [vmem:[%s226] sm:$0xff] %v225
  %228 = vmatpush.msra.mxu0 %v107
  %229 = vmatpush.msra.mxu0 %v106
  %230 = vmatpush.msra.mxu0 %v105
  %231 = vmatpush.msra.mxu0 %v104
  %232 = vmatpush.msra.mxu0 %v103
  %233 = vmatpush.msra.mxu0 %v102
  %234 = vmatpush.msra.mxu0 %v101
  %235 = vmatpush.msra.mxu0 %v100
  %236 = vmatpush.msra.mxu0 %v99
  %237 = vmatpush.msra.mxu0 %v98
  %238 = vmatpush.msra.mxu0 %v97
  %239 = vmatpush.msra.mxu0 %v96
  %240 = vmatpush.msra.mxu0 %v95
  %241 = vmatpush.msra.mxu0 %v94
  %242 = vmatpush.msra.mxu0 %v93
  %243 = vmatpush.msra.mxu0 %v92
  %244 = vmatmul.f32.gmra.mxu0 %v225
  %v245 = vpop.f32.mrf.mxu0
  %v246 = vadd.f32 0.0, %v245
  %247 = vdwg.mxu0
  %v248 = vadd.f32 %v89, %v246
  %v249 = vtanh.pop %v248
  %s250 = scalar_lea.vmem %s5, 40
  %251 = vst [vmem:[%s250] sm:$0xff] %v249
  %252 = vmatpush.msra.mxu0 %v107
  %253 = vmatpush.msra.mxu0 %v106
  %254 = vmatpush.msra.mxu0 %v105
  %255 = vmatpush.msra.mxu0 %v104
  %256 = vmatpush.msra.mxu0 %v103
  %257 = vmatpush.msra.mxu0 %v102
  %258 = vmatpush.msra.mxu0 %v101
  %259 = vmatpush.msra.mxu0 %v100
  %260 = vmatpush.msra.mxu0 %v99
  %261 = vmatpush.msra.mxu0 %v98
  %262 = vmatpush.msra.mxu0 %v97
  %263 = vmatpush.msra.mxu0 %v96
  %264 = vmatpush.msra.mxu0 %v95
  %265 = vmatpush.msra.mxu0 %v94
  %266 = vmatpush.msra.mxu0 %v93
  %267 = vmatpush.msra.mxu0 %v92
  %268 = vmatmul.f32.gmra.mxu0 %v249
  %v269 = vpop.f32.mrf.mxu0
  %v270 = vadd.f32 0.0, %v269
  %271 = vdwg.mxu0
  %v272 = vadd.f32 %v90, %v270
  %v273 = vtanh.pop %v272
  %s274 = scalar_lea.vmem %s5, 48
  %275 = vst [vmem:[%s274] sm:$0xff] %v273
  %276 = vmatpush.msra.mxu0 %v107
  %277 = vmatpush.msra.mxu0 %v106
  %278 = vmatpush.msra.mxu0 %v105
  %279 = vmatpush.msra.mxu0 %v104
  %280 = vmatpush.msra.mxu0 %v103
  %281 = vmatpush.msra.mxu0 %v102
  %282 = vmatpush.msra.mxu0 %v101
  %283 = vmatpush.msra.mxu0 %v100
  %284 = vmatpush.msra.mxu0 %v99
  %285 = vmatpush.msra.mxu0 %v98
  %286 = vmatpush.msra.mxu0 %v97
  %287 = vmatpush.msra.mxu0 %v96
  %288 = vmatpush.msra.mxu0 %v95
  %289 = vmatpush.msra.mxu0 %v94
  %290 = vmatpush.msra.mxu0 %v93
  %291 = vmatpush.msra.mxu0 %v92
  %292 = vmatmul.f32.gmra.mxu0 %v273
  %v293 = vpop.f32.mrf.mxu0
  %v294 = vadd.f32 0.0, %v293
  %295 = vdwg.mxu0
  %v296 = vadd.f32 %v91, %v294
  %v297 = vtanh.pop %v296
  %s298 = scalar_lea.vmem %s5, 56
  %299 = vst [vmem:[%s298] sm:$0xff] %v297
  // Predicated region
  $region22: #{rnn_forward.1} parent=0 // pred_check
    _
  $region23: #{rnn_forward.1} parent=0 // pred_check_branch
    %301 = sbr.rel (0) target = $region25
  $region24: #{rnn_forward.1} parent=0 // pred_region
    _
  $region25: #{rnn_forward.1} parent=0 // pred_fallthru
    _
  // Predicated region
  $region26: #{rnn_forward.1} parent=0 // pred_check
    _
  $region27: #{rnn_forward.1} parent=0 // pred_check_branch
    %303 = sbr.rel (0) target = $region29
  $region28: #{rnn_forward.1} parent=0 // pred_region
    _
  $region29: #{rnn_forward.1} parent=0 // pred_fallthru
    _

</llo_original>
